<compile_context>
chip_gen: v5e
topology: v5e:2x2
jax: 0.10.0
libtpu: 0.0.40
codegen_flags: <defaults>
</compile_context>

<pallas_src>
import functools

import jax
import jax.numpy as jnp
from jax.experimental import pallas as pl
from jax.experimental.pallas import tpu as pltpu

_LANES = 128


def _round_up(n: int, m: int) -> int:
    return (n + m - 1) // m * m


# ----------------------------------------------------------------------------
# Kernel: chained (TILE_B x K) @ (K x 128) matmuls, everything lane-dense.
#   x_ref  : (TILE_B, OBS_PAD)   observations, already cast to the weight dtype
#   w0_ref : (OBS_PAD, 128)      encoder layer-0 weight (zero-padded rows)
#   wl_ref : (L, 128, 128)       remaining layers; layers 0..L-2 get ReLU,
#                                layer L-1 is the fused final layer (no ReLU)
#   b_ref  : (8, 128) f32        packed biases, row l for layer l (l = 0..L)
#   out_ref: (TILE_B, 128) f32   lane-dense output slab
# ----------------------------------------------------------------------------
def _ppg_fused_kernel(act_dtype, x_ref, w0_ref, wl_ref, b_ref, out_ref):
    f32 = jnp.float32
    wdt = w0_ref.dtype
    n_mid = wl_ref.shape[0] - 1          # number of hidden (ReLU) slab layers
    bias_f32 = b_ref[...]                # (8, 128), loaded once
    bias = bias_f32.astype(act_dtype)    # hidden-layer bias in activation dtype

    # layer 0: obs -> 128 (encoder layer 0); x is already in the weight dtype,
    # so no per-tile VPU cast is needed before the MXU.
    h = jnp.dot(x_ref[...], w0_ref[...], preferred_element_type=f32)
    h = jnp.maximum(h.astype(act_dtype) + bias[0:1, :], 0.0)

    # hidden layers (ReLU).  When act_dtype == weight dtype (bf16/bf16 path on
    # v6e/v7x) the astype below is a no-op, so there is exactly one f32->bf16
    # pack per layer (the dot-output cast) and bias/ReLU run in bf16.
    for i in range(n_mid):
        h = jnp.dot(h.astype(wdt), wl_ref[i], preferred_element_type=f32)
        h = jnp.maximum(h.astype(act_dtype) + bias[i + 1:i + 2, :], 0.0)

    # final fused layer: no ReLU, f32 bias add, f32 lane-dense output slab.
    out_ref[...] = (jnp.dot(h.astype(wdt), wl_ref[n_mid],
                            preferred_element_type=f32)
                    + bias_f32[n_mid + 1:n_mid + 2, :])


# ----------------------------------------------------------------------------
# pallas_call wrapper: batch-tiled grid, resident weights, lane-dense output.
# jitted so the cast / row-pad fuse into the surrounding graph (no extra
# HBM round trip for a padded input slab).
# ----------------------------------------------------------------------------
@functools.partial(jax.jit, static_argnames=("act_dtype", "max_tile_b"))
def _ppg_forward(x, w0, wl, bl, *, act_dtype, max_tile_b=2048):
    """Run the fused layer chain; returns the (B, 128) lane-dense output slab."""
    B, obs = x.shape
    obs_pad, H = w0.shape
    wdt = w0.dtype

    # Batch rows padded only to a multiple of 8 (sublane rule); feature dim
    # padded only up to obs_pad (a multiple of 8), NOT to 128 lanes.
    B_pad = _round_up(B, 8)

    # Batch tiling.  Force >= 2 tiles when there is enough work so the
    # "parallel" grid axis can shard across v7x's 2 TensorCores.
    n_tiles = pl.cdiv(B_pad, max_tile_b)
    if n_tiles == 1 and B_pad >= 512:
        n_tiles = 2
    tile_b = _round_up(pl.cdiv(B_pad, n_tiles), 8)
    grid = pl.cdiv(B_pad, tile_b)

    # Single cheap cast (bf16 weights => half the kernel's input DMA bytes and
    # no per-tile astype in the kernel) plus minimal zero padding.
    xin = x.astype(wdt)
    if (B_pad != B) or (obs_pad != obs):
        xin = jnp.pad(xin, ((0, B_pad - B), (0, obs_pad - obs)))

    out = pl.pallas_call(
        functools.partial(_ppg_fused_kernel, act_dtype),
        out_shape=jax.ShapeDtypeStruct((B_pad, H), jnp.float32),
        grid=(grid,),
        in_specs=[
            pl.BlockSpec((tile_b, obs_pad), lambda i: (i, 0)),   # batch-tiled x
            pl.BlockSpec((obs_pad, H), lambda i: (0, 0)),        # resident W0
            pl.BlockSpec(tuple(wl.shape), lambda i: (0, 0, 0)),  # resident W slab
            pl.BlockSpec(tuple(bl.shape), lambda i: (0, 0)),     # resident biases
        ],
        out_specs=pl.BlockSpec((tile_b, H), lambda i: (i, 0)),
        compiler_params=pltpu.CompilerParams(
            dimension_semantics=("parallel",)),  # batch tiles shard over v7x's 2 TCs
    )(xin, w0, wl, bl)
    return out[:B]


# ----------------------------------------------------------------------------
# Parameter packing: raw PPG Linear params -> fused lane-dense slabs.
# ----------------------------------------------------------------------------
def _pack_actor_critic(enc, actor, critic, obs_dim, obs_pad, action_dim, wdtype):
    """Main pack: 1 + 5 matmuls.  logit in lanes [0:A], value in lane A."""
    H = _LANES
    w0, b0, w1, b1, w2, b2 = enc
    aw0, ab0, aw1, ab1, aw2, ab2 = actor
    cw0, cb0, cw1, cb1 = critic
    h0, h1, h2 = w0.shape[1], w1.shape[1], w2.shape[1]
    AH, CH, A = aw0.shape[1], cw0.shape[1], action_dim
    assert max(h0, h1, h2) <= H and (AH + CH) <= H and (A + 1) <= H

    W0 = jnp.zeros((obs_pad, H), jnp.float32).at[:obs_dim, :h0].set(w0)

    Wl = jnp.zeros((5, H, H), jnp.float32)
    Wl = Wl.at[0, :h0, :h1].set(w1)                                  # encoder L1
    Wl = Wl.at[1, :h1, :h2].set(w2)                                  # encoder L2
    Wl = Wl.at[2, :h2, :AH].set(aw0)                                 # actor head L0
    Wl = Wl.at[2, :h2, AH:AH + CH].set(cw0)                          # critic head L0
    Wl = Wl.at[3, :AH, :AH].set(aw1)                                 # actor head L1
    # identity carry for the critic branch; its input is post-ReLU (>= 0) so the
    # shared ReLU on this layer is a no-op for it.
    Wl = Wl.at[3, AH:AH + CH, AH:AH + CH].set(jnp.eye(CH, dtype=jnp.float32))
    Wl = Wl.at[4, :AH, :A].set(aw2)                                  # logit lanes
    Wl = Wl.at[4, AH:AH + CH, A].set(cw1[:, 0])                      # value lane A

    Bl = jnp.zeros((8, H), jnp.float32)
    Bl = Bl.at[0, :h0].set(b0)
    Bl = Bl.at[1, :h1].set(b1)
    Bl = Bl.at[2, :h2].set(b2)
    Bl = Bl.at[3, :AH].set(ab0)
    Bl = Bl.at[3, AH:AH + CH].set(cb0)
    Bl = Bl.at[4, :AH].set(ab1)
    Bl = Bl.at[5, :A].set(ab2)
    Bl = Bl.at[5, A].set(cb1[0])

    return W0.astype(wdtype), Wl.astype(wdtype), Bl     # biases stay f32


def _pack_critic_only(enc, critic, obs_dim, obs_pad, wdtype):
    """Aux (compute_critic) pack: 1 + 4 matmuls, value in lane 0."""
    H = _LANES
    w0, b0, w1, b1, w2, b2 = enc
    cw0, cb0, cw1, cb1 = critic
    h0, h1, h2 = w0.shape[1], w1.shape[1], w2.shape[1]
    CH = cw0.shape[1]
    assert max(h0, h1, h2, CH) <= H

    W0 = jnp.zeros((obs_pad, H), jnp.float32).at[:obs_dim, :h0].set(w0)

    Wl = jnp.zeros((4, H, H), jnp.float32)
    Wl = Wl.at[0, :h0, :h1].set(w1)                                  # encoder L1
    Wl = Wl.at[1, :h1, :h2].set(w2)                                  # encoder L2
    Wl = Wl.at[2, :h2, :CH].set(cw0)                                 # critic head L0
    Wl = Wl.at[3, :CH, 0].set(cw1[:, 0])                             # value lane 0

    Bl = jnp.zeros((8, H), jnp.float32)
    Bl = Bl.at[0, :h0].set(b0)
    Bl = Bl.at[1, :h1].set(b1)
    Bl = Bl.at[2, :h2].set(b2)
    Bl = Bl.at[3, :CH].set(cb0)
    Bl = Bl.at[4, 0].set(cb1[0])

    return W0.astype(wdtype), Wl.astype(wdtype), Bl


# ----------------------------------------------------------------------------
# PPG parameter container + forward dispatch (mirrors the PyTorch module)
# ----------------------------------------------------------------------------
class PallasPPG:
    mode = ['compute_actor', 'compute_critic', 'compute_actor_critic']

    def __init__(self, obs_shape: int, action_shape: int,
                 encoder_hidden_size_list=(128, 128, 64),
                 actor_head_hidden_size: int = 64, actor_head_layer_num: int = 2,
                 critic_head_hidden_size: int = 64, critic_head_layer_num: int = 1,
                 weight_dtype=jnp.bfloat16,   # full-rate MXU + half DMA on all gens
                 act_dtype=None,              # None -> weight_dtype; pass jnp.float32 on v5e
                 max_tile_b: int = 2048,
                 seed: int = 0):
        assert actor_head_layer_num == 2 and critic_head_layer_num == 1
        h0, h1, h2 = encoder_hidden_size_list
        self.A = int(action_shape)
        self.obs_shape = int(obs_shape)
        self.obs_pad = max(_round_up(self.obs_shape, 8), 8)
        self._act_dtype = weight_dtype if act_dtype is None else act_dtype
        self._max_tile_b = int(max_tile_b)
        key = jax.random.PRNGKey(seed)

        def lin(key, fan_in, fan_out):
            kw, kb = jax.random.split(key)
            scale = 1.0 / jnp.sqrt(fan_in)
            w = jax.random.uniform(kw, (fan_in, fan_out), jnp.float32, -scale, scale)
            b = jax.random.uniform(kb, (fan_out,), jnp.float32, -scale, scale)
            return w, b

        keys = jax.random.split(key, 8)
        # shared encoder
        w0, b0 = lin(keys[0], obs_shape, h0)
        w1, b1 = lin(keys[1], h0, h1)
        w2, b2 = lin(keys[2], h1, h2)
        self.encoder = (w0, b0, w1, b1, w2, b2)
        # actor head (DiscreteHead, layer_num=2)
        aw0, ab0 = lin(keys[3], h2, actor_head_hidden_size)
        aw1, ab1 = lin(keys[4], actor_head_hidden_size, actor_head_hidden_size)
        aw2, ab2 = lin(keys[5], actor_head_hidden_size, action_shape)
        self.actor_head = (aw0, ab0, aw1, ab1, aw2, ab2)
        # critic head (RegressionHead, layer_num=1)
        cw0, cb0 = lin(keys[6], h2, critic_head_hidden_size)
        cw1, cb1 = lin(keys[7], critic_head_hidden_size, 1)
        self.critic_head = (cw0, cb0, cw1, cb1)
        # aux_critic = copy.deepcopy(actor_critic.critic) -> separate params, equal at init.
        # compute_critic routes through these, exactly as the PyTorch spec does.
        self.aux_encoder = tuple(jnp.array(p) for p in self.encoder)
        self.aux_critic_head = tuple(jnp.array(p) for p in self.critic_head)

        # Fused, lane-dense parameter slabs consumed by the Pallas kernel.
        # NOTE: with bf16 weights, large-magnitude integer observations (>256)
        # lose ULPs at the first matmul input; pass weight_dtype=jnp.float32 if
        # exact f32 obs handling is required.
        self._main_packed = _pack_actor_critic(
            self.encoder, self.actor_head, self.critic_head,
            self.obs_shape, self.obs_pad, self.A, weight_dtype)
        self._aux_packed = _pack_critic_only(
            self.aux_encoder, self.aux_critic_head,
            self.obs_shape, self.obs_pad, weight_dtype)

    # -------------------------------- forward --------------------------------
    def forward(self, x, mode: str):
        assert mode in self.mode, f'not support forward mode: {mode}/{self.mode}'
        return getattr(self, mode)(x)

    def _run(self, x, packed):
        return _ppg_forward(x, *packed, act_dtype=self._act_dtype,
                            max_tile_b=self._max_tile_b)

    def compute_actor(self, x):
        out = self._run(x, self._main_packed)
        return {'logit': out[:, :self.A]}

    def compute_critic(self, x):
        out = self._run(x, self._aux_packed)       # 5-matmul critic-only pack
        return {'value': out[:, 0]}

    def compute_actor_critic(self, x):
        out = self._run(x, self._main_packed)
        return {'logit': out[:, :self.A], 'value': out[:, self.A]}

    # ------------------------ pure-JAX (unfused) reference -------------------
    def _reference_forward(self, x):
        relu = lambda t: jnp.maximum(t, 0.0)
        lin = lambda h, w, b: h @ w + b
        w0, b0, w1, b1, w2, b2 = self.encoder
        h = relu(lin(x, w0, b0)); h = relu(lin(h, w1, b1)); h = relu(lin(h, w2, b2))
        aw0, ab0, aw1, ab1, aw2, ab2 = self.actor_head
        a = relu(lin(h, aw0, ab0)); a = relu(lin(a, aw1, ab1)); logit = lin(a, aw2, ab2)
        cw0, cb0, cw1, cb1 = self.critic_head
        c = relu(lin(h, cw0, cb0)); value = lin(c, cw1, cb1)[:, 0]
        return logit, value


# ----------------------------------------------------------------------------
if __name__ == "__main__":
    OBS, ACT, BATCH = 32, 6, 8
    x = jax.random.normal(jax.random.PRNGKey(0), (BATCH, OBS), jnp.float32)

    # f32 weights/activations: tight check of the fused-kernel math.
    m32 = PallasPPG(OBS, ACT, weight_dtype=jnp.float32, act_dtype=jnp.float32, seed=0)
    # default (bf16 weights + bf16 activations): fast path; loose tolerance.
    m16 = PallasPPG(OBS, ACT, seed=0)

    for model, atol, rtol in ((m32, 1e-4, 1e-4), (m16, 5e-2, 5e-2)):
        out_ac = model.forward(x, 'compute_actor_critic')
        out_a = model.forward(x, 'compute_actor')
        out_c = model.forward(x, 'compute_critic')
        jax.block_until_ready((out_ac, out_a, out_c))

        # shapes
        assert out_ac['logit'].shape == (BATCH, ACT)
        assert out_ac['value'].shape == (BATCH,)
        assert out_a['logit'].shape == (BATCH, ACT)
        assert out_c['value'].shape == (BATCH,)

        # fused kernel vs. unfused pure-JAX reference
        ref_logit, ref_value = model._reference_forward(x)
        assert jnp.allclose(out_ac['logit'], ref_logit, atol=atol, rtol=rtol)
        assert jnp.allclose(out_ac['value'], ref_value, atol=atol, rtol=rtol)

        # aux_critic is a deepcopy of (encoder, critic_head) => equal at init,
        # even though compute_critic runs the shorter 5-matmul pack.
        assert jnp.allclose(out_ac['value'], out_c['value'], atol=max(atol, 1e-3))
        assert jnp.allclose(out_ac['logit'], out_a['logit'], atol=max(atol, 1e-3))

    # non-multiple-of-8 batch exercises the wrapper's minimal row padding path
    x2 = jax.random.normal(jax.random.PRNGKey(1), (12, OBS), jnp.float32)
    out2 = m32.forward(x2, 'compute_actor_critic')
    jax.block_until_ready(out2)
    ref_logit2, ref_value2 = m32._reference_forward(x2)
    assert out2['logit'].shape == (12, ACT) and out2['value'].shape == (12,)
    assert jnp.allclose(out2['logit'], ref_logit2, atol=1e-4, rtol=1e-4)
    assert jnp.allclose(out2['value'], ref_value2, atol=1e-4, rtol=1e-4)

    print("KERNEL_OK")
</pallas_src>

<mosaic_0001>
module attributes {stable_mosaic.version = 11 : i64} {
  func.func @_ppg_fused_kernel(%arg0: i32, %arg1: memref<8x32xf32, #tpu.memory_space<vmem>>, %arg2: memref<32x128xf32, #tpu.memory_space<vmem>>, %arg3: memref<5x128x128xf32, #tpu.memory_space<vmem>>, %arg4: memref<8x128xf32, #tpu.memory_space<vmem>>, %arg5: memref<8x128xf32, #tpu.memory_space<vmem>>) attributes {dimension_semantics = [#tpu.dimension_semantics<parallel>], iteration_bounds = array<i64: 1>, scalar_prefetch = 0 : i64, scratch_operands = 0 : i64, tpu.core_type = #tpu.core_type<tc>, window_params = [{transform_indices = @transform_0, window_bounds = array<i64: 8, 32>}, {pipeline_mode = #tpu.pipeline_mode<synchronous>, transform_indices = @transform_1, window_bounds = array<i64: 32, 128>}, {pipeline_mode = #tpu.pipeline_mode<synchronous>, transform_indices = @transform_2, window_bounds = array<i64: 5, 128, 128>}, {pipeline_mode = #tpu.pipeline_mode<synchronous>, transform_indices = @transform_3, window_bounds = array<i64: 8, 128>}, {transform_indices = @transform_4, window_bounds = array<i64: 8, 128>}]} {
    %c0 = arith.constant 0 : index
    %c0_0 = arith.constant 0 : index
    %0 = vector.load %arg4[%c0, %c0_0] : memref<8x128xf32, #tpu.memory_space<vmem>>, vector<8x128xf32>
    %c0_1 = arith.constant 0 : index
    %c0_2 = arith.constant 0 : index
    %1 = vector.load %arg1[%c0_1, %c0_2] : memref<8x32xf32, #tpu.memory_space<vmem>>, vector<8x32xf32>
    %c0_3 = arith.constant 0 : index
    %c0_4 = arith.constant 0 : index
    %2 = vector.load %arg2[%c0_3, %c0_4] : memref<32x128xf32, #tpu.memory_space<vmem>>, vector<32x128xf32>
    %cst = arith.constant dense<0.000000e+00> : vector<8x128xf32>
    %3 = tpu.matmul %1, %2, %cst {dimension_numbers = #tpu.dot_dimension_numbers<[1], [0], [0], [1], [0, 0, 1, 1], [], []>} : vector<8x32xf32>, vector<32x128xf32>, vector<8x128xf32> -> vector<8x128xf32>
    %4 = vector.extract_strided_slice %0 {offsets = [0, 0], sizes = [1, 128], strides = [1, 1]} : vector<8x128xf32> to vector<1x128xf32>
    %5 = vector.broadcast %4 : vector<1x128xf32> to vector<8x128xf32>
    %6 = arith.addf %3, %5 : vector<8x128xf32>
    %cst_5 = arith.constant 0.000000e+00 : f32
    %7 = vector.broadcast %cst_5 : f32 to vector<8x128xf32>
    %8 = arith.maximumf %6, %7 : vector<8x128xf32>
    %c0_6 = arith.constant 0 : index
    %c0_7 = arith.constant 0 : index
    %c0_8 = arith.constant 0 : index
    %9 = vector.load %arg3[%c0_6, %c0_7, %c0_8] : memref<5x128x128xf32, #tpu.memory_space<vmem>>, vector<1x128x128xf32>
    %10 = vector.shape_cast %9 : vector<1x128x128xf32> to vector<128x128xf32>
    %cst_9 = arith.constant dense<0.000000e+00> : vector<8x128xf32>
    %11 = tpu.matmul %8, %10, %cst_9 {dimension_numbers = #tpu.dot_dimension_numbers<[1], [0], [0], [1], [0, 0, 1, 1], [], []>} : vector<8x128xf32>, vector<128x128xf32>, vector<8x128xf32> -> vector<8x128xf32>
    %12 = vector.extract_strided_slice %0 {offsets = [1, 0], sizes = [1, 128], strides = [1, 1]} : vector<8x128xf32> to vector<1x128xf32>
    %13 = vector.broadcast %12 : vector<1x128xf32> to vector<8x128xf32>
    %14 = arith.addf %11, %13 : vector<8x128xf32>
    %cst_10 = arith.constant 0.000000e+00 : f32
    %15 = vector.broadcast %cst_10 : f32 to vector<8x128xf32>
    %16 = arith.maximumf %14, %15 : vector<8x128xf32>
    %c1 = arith.constant 1 : index
    %c0_11 = arith.constant 0 : index
    %c0_12 = arith.constant 0 : index
    %17 = vector.load %arg3[%c1, %c0_11, %c0_12] : memref<5x128x128xf32, #tpu.memory_space<vmem>>, vector<1x128x128xf32>
    %18 = vector.shape_cast %17 : vector<1x128x128xf32> to vector<128x128xf32>
    %cst_13 = arith.constant dense<0.000000e+00> : vector<8x128xf32>
    %19 = tpu.matmul %16, %18, %cst_13 {dimension_numbers = #tpu.dot_dimension_numbers<[1], [0], [0], [1], [0, 0, 1, 1], [], []>} : vector<8x128xf32>, vector<128x128xf32>, vector<8x128xf32> -> vector<8x128xf32>
    %20 = vector.extract_strided_slice %0 {offsets = [2, 0], sizes = [1, 128], strides = [1, 1]} : vector<8x128xf32> to vector<1x128xf32>
    %21 = vector.broadcast %20 : vector<1x128xf32> to vector<8x128xf32>
    %22 = arith.addf %19, %21 : vector<8x128xf32>
    %cst_14 = arith.constant 0.000000e+00 : f32
    %23 = vector.broadcast %cst_14 : f32 to vector<8x128xf32>
    %24 = arith.maximumf %22, %23 : vector<8x128xf32>
    %c2 = arith.constant 2 : index
    %c0_15 = arith.constant 0 : index
    %c0_16 = arith.constant 0 : index
    %25 = vector.load %arg3[%c2, %c0_15, %c0_16] : memref<5x128x128xf32, #tpu.memory_space<vmem>>, vector<1x128x128xf32>
    %26 = vector.shape_cast %25 : vector<1x128x128xf32> to vector<128x128xf32>
    %cst_17 = arith.constant dense<0.000000e+00> : vector<8x128xf32>
    %27 = tpu.matmul %24, %26, %cst_17 {dimension_numbers = #tpu.dot_dimension_numbers<[1], [0], [0], [1], [0, 0, 1, 1], [], []>} : vector<8x128xf32>, vector<128x128xf32>, vector<8x128xf32> -> vector<8x128xf32>
    %28 = vector.extract_strided_slice %0 {offsets = [3, 0], sizes = [1, 128], strides = [1, 1]} : vector<8x128xf32> to vector<1x128xf32>
    %29 = vector.broadcast %28 : vector<1x128xf32> to vector<8x128xf32>
    %30 = arith.addf %27, %29 : vector<8x128xf32>
    %cst_18 = arith.constant 0.000000e+00 : f32
    %31 = vector.broadcast %cst_18 : f32 to vector<8x128xf32>
    %32 = arith.maximumf %30, %31 : vector<8x128xf32>
    %c3 = arith.constant 3 : index
    %c0_19 = arith.constant 0 : index
    %c0_20 = arith.constant 0 : index
    %33 = vector.load %arg3[%c3, %c0_19, %c0_20] : memref<5x128x128xf32, #tpu.memory_space<vmem>>, vector<1x128x128xf32>
    %34 = vector.shape_cast %33 : vector<1x128x128xf32> to vector<128x128xf32>
    %cst_21 = arith.constant dense<0.000000e+00> : vector<8x128xf32>
    %35 = tpu.matmul %32, %34, %cst_21 {dimension_numbers = #tpu.dot_dimension_numbers<[1], [0], [0], [1], [0, 0, 1, 1], [], []>} : vector<8x128xf32>, vector<128x128xf32>, vector<8x128xf32> -> vector<8x128xf32>
    %36 = vector.extract_strided_slice %0 {offsets = [4, 0], sizes = [1, 128], strides = [1, 1]} : vector<8x128xf32> to vector<1x128xf32>
    %37 = vector.broadcast %36 : vector<1x128xf32> to vector<8x128xf32>
    %38 = arith.addf %35, %37 : vector<8x128xf32>
    %cst_22 = arith.constant 0.000000e+00 : f32
    %39 = vector.broadcast %cst_22 : f32 to vector<8x128xf32>
    %40 = arith.maximumf %38, %39 : vector<8x128xf32>
    %c4 = arith.constant 4 : index
    %c0_23 = arith.constant 0 : index
    %c0_24 = arith.constant 0 : index
    %41 = vector.load %arg3[%c4, %c0_23, %c0_24] : memref<5x128x128xf32, #tpu.memory_space<vmem>>, vector<1x128x128xf32>
    %42 = vector.shape_cast %41 : vector<1x128x128xf32> to vector<128x128xf32>
    %cst_25 = arith.constant dense<0.000000e+00> : vector<8x128xf32>
    %43 = tpu.matmul %40, %42, %cst_25 {dimension_numbers = #tpu.dot_dimension_numbers<[1], [0], [0], [1], [0, 0, 1, 1], [], []>} : vector<8x128xf32>, vector<128x128xf32>, vector<8x128xf32> -> vector<8x128xf32>
    %44 = vector.extract_strided_slice %0 {offsets = [5, 0], sizes = [1, 128], strides = [1, 1]} : vector<8x128xf32> to vector<1x128xf32>
    %45 = vector.broadcast %44 : vector<1x128xf32> to vector<8x128xf32>
    %46 = arith.addf %43, %45 : vector<8x128xf32>
    %c0_26 = arith.constant 0 : index
    %c0_27 = arith.constant 0 : index
    %47 = vector.load %arg5[%c0_26, %c0_27] : memref<8x128xf32, #tpu.memory_space<vmem>>, vector<8x128xf32>
    tpu.vector_store %arg5[%c0_26, %c0_27], %46 {strides = array<i32>} : memref<8x128xf32, #tpu.memory_space<vmem>>, vector<8x128xf32>,
    return
  }
  func.func @transform_0(%arg0: i32) -> (i32, i32) {
    %c0_i32 = arith.constant 0 : i32
    %c0_i32_0 = arith.constant 0 : i32
    return %arg0, %c0_i32 : i32, i32
  }
  func.func @transform_1(%arg0: i32) -> (i32, i32) {
    %c0_i32 = arith.constant 0 : i32
    %c0_i32_0 = arith.constant 0 : i32
    %c0_i32_1 = arith.constant 0 : i32
    return %c0_i32, %c0_i32_0 : i32, i32
  }
  func.func @transform_2(%arg0: i32) -> (i32, i32, i32) {
    %c0_i32 = arith.constant 0 : i32
    %c0_i32_0 = arith.constant 0 : i32
    %c0_i32_1 = arith.constant 0 : i32
    %c0_i32_2 = arith.constant 0 : i32
    return %c0_i32, %c0_i32_0, %c0_i32_1 : i32, i32, i32
  }
  func.func @transform_3(%arg0: i32) -> (i32, i32) {
    %c0_i32 = arith.constant 0 : i32
    %c0_i32_0 = arith.constant 0 : i32
    %c0_i32_1 = arith.constant 0 : i32
    return %c0_i32, %c0_i32_0 : i32, i32
  }
  func.func @transform_4(%arg0: i32) -> (i32, i32) {
    %c0_i32 = arith.constant 0 : i32
    %c0_i32_0 = arith.constant 0 : i32
    return %arg0, %c0_i32 : i32, i32
  }
}

</mosaic_0001>

<llo_original>
// kernel: _ppg_forward.1
$region0: #{_ppg_forward.1}
  #allocation0 [shape = 'u32[]', space=smem, size = 0x4, offset = 0x4, fixed_abs, tag = 'smem constant byte address 0x4 - core index']
  #allocation1 [shape = 'u32[72,128]{1,0:T(1,128)}', space=vmem, size = 0x9000, scoped, tag = 'internal scratch']
  %s0 = inlined_call_operand.hbm [shape: f32[8,32], index: 0, kind: input, shape index: {}]
  %s1 = inlined_call_operand.hbm [shape: f32[32,128], index: 1, kind: input, shape index: {}]
  %s2 = inlined_call_operand.hbm [shape: f32[5,128,128], index: 2, kind: input, shape index: {}]
  %s3 = inlined_call_operand.hbm [shape: f32[8,128], index: 3, kind: input, shape index: {}]
  %s4 = inlined_call_operand.hbm [shape: f32[8,128], index: 4, kind: output, shape index: {}]
  %s5 = sld [smem:[#allocation0]]
  $region42: #{_ppg_forward.1} parent=0
    _
  %s7 = ssub.s32 1, %s5
  %s8 = scalar_select 0, %s7, %s5
  $region1: #{_ppg_forward.1} parent=0
    #allocation2 [shape = 'u8[4096]{0}', space=vmem, size = 0x1000, scoped, tag = 'input window, operand 0, single buffered']
    #allocation3 [shape = 's32[1]{0}', space=sflag, size = 0x4, scoped, tag = 'scoped memory for _ppg_forward.1']
    #allocation4 [shape = 's32[1]{0}', space=sflag, size = 0x4, scoped, tag = 'scoped memory for _ppg_forward.1']
    #allocation5 [shape = 'u8[16384]{0}', space=vmem, size = 0x4000, scoped, tag = 'input window, operand 1, single buffered']
    #allocation6 [shape = 's32[1]{0}', space=sflag, size = 0x4, scoped, tag = 'scoped memory for _ppg_forward.1']
    #allocation7 [shape = 'u8[327680]{0}', space=vmem, size = 0x50000, scoped, tag = 'input window, operand 2, single buffered']
    #allocation8 [shape = 'u8[4096]{0}', space=vmem, size = 0x1000, scoped, tag = 'input window, operand 3, single buffered']
    #allocation9 [shape = 's32[1]{0}', space=sflag, size = 0x4, scoped, tag = 'scoped memory for _ppg_forward.1']
    #allocation10 [shape = 'u8[4096]{0}', space=vmem, size = 0x1000, scoped, tag = 'output window, operand 0, single buffered']
    %9 = vsyncpa [#allocation3], 0
    %10 = vsyncpa [#allocation6], 0
    %11 = vsyncpa [#allocation9], 0
    %12 = vsyncpa [#allocation4], 0
    // Predicated region
    $region2: #{_ppg_forward.1} parent=1 // pred_check
      _
    $region3: #{_ppg_forward.1} parent=1 // pred_check_branch
      %14 = sbr.rel (0) target = $region5
    $region4: #{_ppg_forward.1} parent=1 // pred_region
      %16 = vsyncadd [#allocation3], 0
      %s18 = sshll.u32 %s0, 4
      %s19 = int_to_ptr.hbm [resolvable:$true] %s18
      %s20 = sshll.u32 [#allocation2], 4
      %s21 = int_to_ptr.vmem [resolvable:$true] %s20
      %23 = dma.hbm_to_vmem [thread:$0]  %s19, 128, %s21, [#allocation3]
    $region5: #{_ppg_forward.1} parent=1 // pred_fallthru
      _
    // Predicated region
    $region6: #{_ppg_forward.1} parent=1 // pred_check
      _
    $region7: #{_ppg_forward.1} parent=1 // pred_check_branch
      %25 = sbr.rel (0) target = $region9
    $region8: #{_ppg_forward.1} parent=1 // pred_region
      %27 = vsyncadd [#allocation6], 0
      %s28 = sshll.u32 %s1, 4
      %s29 = int_to_ptr.hbm [resolvable:$true] %s28
      %s30 = sshll.u32 [#allocation5], 4
      %s31 = int_to_ptr.vmem [resolvable:$true] %s30
      %36 = dma.hbm_to_vmem [thread:$0]  %s29, 512, %s31, [#allocation6], 128, 128, 8
    $region9: #{_ppg_forward.1} parent=1 // pred_fallthru
      _
    // Predicated region
    $region10: #{_ppg_forward.1} parent=1 // pred_check
      _
    $region11: #{_ppg_forward.1} parent=1 // pred_check_branch
      %38 = sbr.rel (0) target = $region13
    $region12: #{_ppg_forward.1} parent=1 // pred_region
      %40 = vsyncadd [#allocation6], 0
      %s41 = sshll.u32 %s2, 4
      %s42 = int_to_ptr.hbm [resolvable:$true] %s41
      %s43 = sshll.u32 [#allocation7], 4
      %s44 = int_to_ptr.vmem [resolvable:$true] %s43
      %49 = dma.hbm_to_vmem [thread:$0]  %s42, 10240, %s44, [#allocation6], 128, 128, 8
    $region13: #{_ppg_forward.1} parent=1 // pred_fallthru
      _
    // Predicated region
    $region14: #{_ppg_forward.1} parent=1 // pred_check
      _
    $region15: #{_ppg_forward.1} parent=1 // pred_check_branch
      %51 = sbr.rel (0) target = $region17
    $region16: #{_ppg_forward.1} parent=1 // pred_region
      %53 = vsyncadd [#allocation9], 0
      %s55 = sshll.u32 %s3, 4
      %s56 = int_to_ptr.hbm [resolvable:$true] %s55
      %s57 = sshll.u32 [#allocation8], 4
      %s58 = int_to_ptr.vmem [resolvable:$true] %s57
      %60 = dma.hbm_to_vmem [thread:$0]  %s56, 128, %s58, [#allocation9]
    $region17: #{_ppg_forward.1} parent=1 // pred_fallthru
      _
    // Predicated region
    $region18: #{_ppg_forward.1} parent=1 // pred_check
      _
    $region19: #{_ppg_forward.1} parent=1 // pred_check_branch
      %62 = sbr.rel (0) target = $region21
    $region20: #{_ppg_forward.1} parent=1 // pred_region
      %64 = dma.done [#allocation3], 128
    $region21: #{_ppg_forward.1} parent=1 // pred_fallthru
      _
    // Predicated region
    $region22: #{_ppg_forward.1} parent=1 // pred_check
      _
    $region23: #{_ppg_forward.1} parent=1 // pred_check_branch
      %66 = sbr.rel (0) target = $region25
    $region24: #{_ppg_forward.1} parent=1 // pred_region
      %68 = dma.done [#allocation6], 512
    $region25: #{_ppg_forward.1} parent=1 // pred_fallthru
      _
    // Predicated region
    $region26: #{_ppg_forward.1} parent=1 // pred_check
      _
    $region27: #{_ppg_forward.1} parent=1 // pred_check_branch
      %70 = sbr.rel (0) target = $region29
    $region28: #{_ppg_forward.1} parent=1 // pred_region
      %72 = dma.done [#allocation6], 10240
    $region29: #{_ppg_forward.1} parent=1 // pred_fallthru
      _
    // Predicated region
    $region30: #{_ppg_forward.1} parent=1 // pred_check
      _
    $region31: #{_ppg_forward.1} parent=1 // pred_check_branch
      %74 = sbr.rel (0) target = $region33
    $region32: #{_ppg_forward.1} parent=1 // pred_region
      %76 = dma.done [#allocation9], 128
    $region33: #{_ppg_forward.1} parent=1 // pred_fallthru
      _
    %v77 = vld [vmem:[#allocation8] sm:$0xff]
    %v78 = vld [vmem:[#allocation2] sm:$0xff]
    %v79 = vld [vmem:[#allocation5] sm:$0xff]
    %v80 = vld [vmem:[#allocation5 + $0x8] sm:$0xff]
    %v81 = vld [vmem:[#allocation5 + $0x10] sm:$0xff]
    %v82 = vld [vmem:[#allocation5 + $0x18] sm:$0xff]
    %v83 = vperm.slane %v77, 0
    %vm84 = vcmask 261120
    %v86 = vsel %vm84, %v78, 0
    %88 = vmatpush.msra.mxu0 0.0
    %89 = vmatpush.msra.mxu0 0.0
    %90 = vmatpush.msra.mxu0 0.0
    %91 = vmatpush.msra.mxu0 0.0
    %92 = vmatpush.msra.mxu0 0.0
    %93 = vmatpush.msra.mxu0 0.0
    %94 = vmatpush.msra.mxu0 0.0
    %95 = vmatpush.msra.mxu0 0.0
    %96 = vmatpush.msra.mxu0 0.0
    %97 = vmatpush.msra.mxu0 0.0
    %98 = vmatpush.msra.mxu0 0.0
    %99 = vmatpush.msra.mxu0 0.0
    %100 = vmatpush.msra.mxu0 %v82
    %101 = vmatpush.msra.mxu0 %v81
    %102 = vmatpush.msra.mxu0 %v80
    %103 = vmatpush.msra.mxu0 %v79
    %104 = vmatmul.f32.gmra.mxu0 %v86
    %v105 = vpop.f32.mrf.mxu0
    %v106 = vadd.f32 %v83, %v105
    %107 = vdwg.mxu0
    %v108 = vmax.f32 %v106, 0.0
    %v109 = vld [vmem:[#allocation7] sm:$0xff]
    %v110 = vld [vmem:[#allocation7 + $0x8] sm:$0xff]
    %v111 = vld [vmem:[#allocation7 + $0x10] sm:$0xff]
    %v112 = vld [vmem:[#allocation7 + $0x18] sm:$0xff]
    %v113 = vld [vmem:[#allocation7 + $0x20] sm:$0xff]
    %v114 = vld [vmem:[#allocation7 + $0x28] sm:$0xff]
    %v115 = vld [vmem:[#allocation7 + $0x30] sm:$0xff]
    %v116 = vld [vmem:[#allocation7 + $0x38] sm:$0xff]
    %v117 = vld [vmem:[#allocation7 + $0x40] sm:$0xff]
    %v118 = vld [vmem:[#allocation7 + $0x48] sm:$0xff]
    %v119 = vld [vmem:[#allocation7 + $0x50] sm:$0xff]
    %v120 = vld [vmem:[#allocation7 + $0x58] sm:$0xff]
    %v121 = vld [vmem:[#allocation7 + $0x60] sm:$0xff]
    %v122 = vld [vmem:[#allocation7 + $0x68] sm:$0xff]
    %v123 = vld [vmem:[#allocation7 + $0x70] sm:$0xff]
    %v124 = vld [vmem:[#allocation7 + $0x78] sm:$0xff]
    %v125 = vperm.slane %v77, 1
    %126 = vmatpush.msra.mxu0 %v124
    %127 = vmatpush.msra.mxu0 %v123
    %128 = vmatpush.msra.mxu0 %v122
    %129 = vmatpush.msra.mxu0 %v121
    %130 = vmatpush.msra.mxu0 %v120
    %131 = vmatpush.msra.mxu0 %v119
    %132 = vmatpush.msra.mxu0 %v118
    %133 = vmatpush.msra.mxu0 %v117
    %134 = vmatpush.msra.mxu0 %v116
    %135 = vmatpush.msra.mxu0 %v115
    %136 = vmatpush.msra.mxu0 %v114
    %137 = vmatpush.msra.mxu0 %v113
    %138 = vmatpush.msra.mxu0 %v112
    %139 = vmatpush.msra.mxu0 %v111
    %140 = vmatpush.msra.mxu0 %v110
    %141 = vmatpush.msra.mxu0 %v109
    %142 = vmatmul.f32.gmra.mxu0 %v108
    %v143 = vpop.f32.mrf.mxu0
    %v144 = vadd.f32 %v125, %v143
    %145 = vdwg.mxu0
    %v146 = vmax.f32 %v144, 0.0
    %s147 = scalar_lea.vmem [#allocation7], 128
    %v148 = vld [vmem:[%s147] sm:$0xff]
    %v149 = vld [vmem:[%s147 + $0x8] sm:$0xff]
    %v150 = vld [vmem:[%s147 + $0x10] sm:$0xff]
    %v151 = vld [vmem:[%s147 + $0x18] sm:$0xff]
    %v152 = vld [vmem:[%s147 + $0x20] sm:$0xff]
    %v153 = vld [vmem:[%s147 + $0x28] sm:$0xff]
    %v154 = vld [vmem:[%s147 + $0x30] sm:$0xff]
    %v155 = vld [vmem:[%s147 + $0x38] sm:$0xff]
    %v156 = vld [vmem:[%s147 + $0x40] sm:$0xff]
    %v157 = vld [vmem:[%s147 + $0x48] sm:$0xff]
    %v158 = vld [vmem:[%s147 + $0x50] sm:$0xff]
    %v159 = vld [vmem:[%s147 + $0x58] sm:$0xff]
    %v160 = vld [vmem:[%s147 + $0x60] sm:$0xff]
    %v161 = vld [vmem:[%s147 + $0x68] sm:$0xff]
    %v162 = vld [vmem:[%s147 + $0x70] sm:$0xff]
    %v163 = vld [vmem:[%s147 + $0x78] sm:$0xff]
    %v164 = vperm.slane %v77, 2
    %165 = vmatpush.msra.mxu0 %v163
    %166 = vmatpush.msra.mxu0 %v162
    %167 = vmatpush.msra.mxu0 %v161
    %168 = vmatpush.msra.mxu0 %v160
    %169 = vmatpush.msra.mxu0 %v159
    %170 = vmatpush.msra.mxu0 %v158
    %171 = vmatpush.msra.mxu0 %v157
    %172 = vmatpush.msra.mxu0 %v156
    %173 = vmatpush.msra.mxu0 %v155
    %174 = vmatpush.msra.mxu0 %v154
    %175 = vmatpush.msra.mxu0 %v153
    %176 = vmatpush.msra.mxu0 %v152
    %177 = vmatpush.msra.mxu0 %v151
    %178 = vmatpush.msra.mxu0 %v150
    %179 = vmatpush.msra.mxu0 %v149
    %180 = vmatpush.msra.mxu0 %v148
    %181 = vmatmul.f32.gmra.mxu0 %v146
    %v182 = vpop.f32.mrf.mxu0
    %v183 = vadd.f32 %v164, %v182
    %184 = vdwg.mxu0
    %v185 = vmax.f32 %v183, 0.0
    %s186 = scalar_lea.vmem [#allocation7], 256
    %v187 = vld [vmem:[%s186] sm:$0xff]
    %v188 = vld [vmem:[%s186 + $0x8] sm:$0xff]
    %v189 = vld [vmem:[%s186 + $0x10] sm:$0xff]
    %v190 = vld [vmem:[%s186 + $0x18] sm:$0xff]
    %v191 = vld [vmem:[%s186 + $0x20] sm:$0xff]
    %v192 = vld [vmem:[%s186 + $0x28] sm:$0xff]
    %v193 = vld [vmem:[%s186 + $0x30] sm:$0xff]
    %v194 = vld [vmem:[%s186 + $0x38] sm:$0xff]
    %v195 = vld [vmem:[%s186 + $0x40] sm:$0xff]
    %v196 = vld [vmem:[%s186 + $0x48] sm:$0xff]
    %v197 = vld [vmem:[%s186 + $0x50] sm:$0xff]
    %v198 = vld [vmem:[%s186 + $0x58] sm:$0xff]
    %v199 = vld [vmem:[%s186 + $0x60] sm:$0xff]
    %v200 = vld [vmem:[%s186 + $0x68] sm:$0xff]
    %v201 = vld [vmem:[%s186 + $0x70] sm:$0xff]
    %v202 = vld [vmem:[%s186 + $0x78] sm:$0xff]
    %v203 = vperm.slane %v77, 3
    %204 = vmatpush.msra.mxu0 %v202
    %205 = vmatpush.msra.mxu0 %v201
    %206 = vmatpush.msra.mxu0 %v200
    %207 = vmatpush.msra.mxu0 %v199
    %208 = vmatpush.msra.mxu0 %v198
    %209 = vmatpush.msra.mxu0 %v197
    %210 = vmatpush.msra.mxu0 %v196
    %211 = vmatpush.msra.mxu0 %v195
    %212 = vmatpush.msra.mxu0 %v194
    %213 = vmatpush.msra.mxu0 %v193
    %214 = vmatpush.msra.mxu0 %v192
    %215 = vmatpush.msra.mxu0 %v191
    %216 = vmatpush.msra.mxu0 %v190
    %217 = vmatpush.msra.mxu0 %v189
    %218 = vmatpush.msra.mxu0 %v188
    %219 = vmatpush.msra.mxu0 %v187
    %220 = vmatmul.f32.gmra.mxu0 %v185
    %v221 = vpop.f32.mrf.mxu0
    %v222 = vadd.f32 %v203, %v221
    %223 = vdwg.mxu0
    %v224 = vmax.f32 %v222, 0.0
    %s225 = scalar_lea.vmem [#allocation7], 384
    %v226 = vld [vmem:[%s225] sm:$0xff]
    %v227 = vld [vmem:[%s225 + $0x8] sm:$0xff]
    %v228 = vld [vmem:[%s225 + $0x10] sm:$0xff]
    %v229 = vld [vmem:[%s225 + $0x18] sm:$0xff]
    %v230 = vld [vmem:[%s225 + $0x20] sm:$0xff]
    %v231 = vld [vmem:[%s225 + $0x28] sm:$0xff]
    %v232 = vld [vmem:[%s225 + $0x30] sm:$0xff]
    %v233 = vld [vmem:[%s225 + $0x38] sm:$0xff]
    %v234 = vld [vmem:[%s225 + $0x40] sm:$0xff]
    %v235 = vld [vmem:[%s225 + $0x48] sm:$0xff]
    %v236 = vld [vmem:[%s225 + $0x50] sm:$0xff]
    %v237 = vld [vmem:[%s225 + $0x58] sm:$0xff]
    %v238 = vld [vmem:[%s225 + $0x60] sm:$0xff]
    %v239 = vld [vmem:[%s225 + $0x68] sm:$0xff]
    %v240 = vld [vmem:[%s225 + $0x70] sm:$0xff]
    %v241 = vld [vmem:[%s225 + $0x78] sm:$0xff]
    %v242 = vperm.slane %v77, 4
    %243 = vmatpush.msra.mxu0 %v241
    %244 = vmatpush.msra.mxu0 %v240
    %245 = vmatpush.msra.mxu0 %v239
    %246 = vmatpush.msra.mxu0 %v238
    %247 = vmatpush.msra.mxu0 %v237
    %248 = vmatpush.msra.mxu0 %v236
    %249 = vmatpush.msra.mxu0 %v235
    %250 = vmatpush.msra.mxu0 %v234
    %251 = vmatpush.msra.mxu0 %v233
    %252 = vmatpush.msra.mxu0 %v232
    %253 = vmatpush.msra.mxu0 %v231
    %254 = vmatpush.msra.mxu0 %v230
    %255 = vmatpush.msra.mxu0 %v229
    %256 = vmatpush.msra.mxu0 %v228
    %257 = vmatpush.msra.mxu0 %v227
    %258 = vmatpush.msra.mxu0 %v226
    %259 = vmatmul.f32.gmra.mxu0 %v224
    %v260 = vpop.f32.mrf.mxu0
    %v261 = vadd.f32 %v242, %v260
    %262 = vdwg.mxu0
    %v263 = vmax.f32 %v261, 0.0
    %s264 = scalar_lea.vmem [#allocation7], 512
    %v265 = vld [vmem:[%s264] sm:$0xff]
    %v266 = vld [vmem:[%s264 + $0x8] sm:$0xff]
    %v267 = vld [vmem:[%s264 + $0x10] sm:$0xff]
    %v268 = vld [vmem:[%s264 + $0x18] sm:$0xff]
    %v269 = vld [vmem:[%s264 + $0x20] sm:$0xff]
    %v270 = vld [vmem:[%s264 + $0x28] sm:$0xff]
    %v271 = vld [vmem:[%s264 + $0x30] sm:$0xff]
    %v272 = vld [vmem:[%s264 + $0x38] sm:$0xff]
    %v273 = vld [vmem:[%s264 + $0x40] sm:$0xff]
    %v274 = vld [vmem:[%s264 + $0x48] sm:$0xff]
    %v275 = vld [vmem:[%s264 + $0x50] sm:$0xff]
    %v276 = vld [vmem:[%s264 + $0x58] sm:$0xff]
    %v277 = vld [vmem:[%s264 + $0x60] sm:$0xff]
    %v278 = vld [vmem:[%s264 + $0x68] sm:$0xff]
    %v279 = vld [vmem:[%s264 + $0x70] sm:$0xff]
    %v280 = vld [vmem:[%s264 + $0x78] sm:$0xff]
    %v281 = vperm.slane %v77, 5
    %282 = vmatpush.msra.mxu0 %v280
    %283 = vmatpush.msra.mxu0 %v279
    %284 = vmatpush.msra.mxu0 %v278
    %285 = vmatpush.msra.mxu0 %v277
    %286 = vmatpush.msra.mxu0 %v276
    %287 = vmatpush.msra.mxu0 %v275
    %288 = vmatpush.msra.mxu0 %v274
    %289 = vmatpush.msra.mxu0 %v273
    %290 = vmatpush.msra.mxu0 %v272
    %291 = vmatpush.msra.mxu0 %v271
    %292 = vmatpush.msra.mxu0 %v270
    %293 = vmatpush.msra.mxu0 %v269
    %294 = vmatpush.msra.mxu0 %v268
    %295 = vmatpush.msra.mxu0 %v267
    %296 = vmatpush.msra.mxu0 %v266
    %297 = vmatpush.msra.mxu0 %v265
    %298 = vmatmul.f32.gmra.mxu0 %v263
    %v299 = vpop.f32.mrf.mxu0
    %v300 = vadd.f32 %v281, %v299
    %301 = vdwg.mxu0
    %302 = vst [vmem:[#allocation10] sm:$0xff] %v300
    // Predicated region
    $region34: #{_ppg_forward.1} parent=1 // pred_check
      _
    $region35: #{_ppg_forward.1} parent=1 // pred_check_branch
      %304 = sbr.rel (0) target = $region37
    $region36: #{_ppg_forward.1} parent=1 // pred_region
      %306 = vsyncadd [#allocation4], 0
      %s308 = sshll.u32 [#allocation10], 4
      %s309 = int_to_ptr.vmem [resolvable:$true] %s308
      %s310 = sshll.u32 %s4, 4
      %s311 = int_to_ptr.hbm [resolvable:$true] %s310
      %313 = dma.vmem_to_hbm [thread:$0]  %s309, 128, %s311, [#allocation4]
    $region37: #{_ppg_forward.1} parent=1 // pred_fallthru
      _
    // Predicated region
    $region38: #{_ppg_forward.1} parent=1 // pred_check
      _
    $region39: #{_ppg_forward.1} parent=1 // pred_check_branch
      %315 = sbr.rel (0) target = $region41
    $region40: #{_ppg_forward.1} parent=1 // pred_region
      %317 = dma.done [#allocation4], 128
    $region41: #{_ppg_forward.1} parent=1 // pred_fallthru
      _
    %318 = vsyncpa [#allocation3], 1
    %319 = vsyncpa [#allocation6], 1
    %320 = vsyncpa [#allocation9], 1
    %321 = vsyncpa [#allocation4], 1

</llo_original>
